<compile_context>
chip_gen: v7x
topology: tpu7x:2x2x1
jax: 0.10.0
libtpu: 0.0.40
codegen_flags: <defaults>
</compile_context>

<pallas_src>
import functools

import jax
import jax.numpy as jnp
from jax.experimental import pallas as pl
from jax.experimental.pallas import tpu as pltpu


def _wmse_kernel(x_ref, t_ref, s_ref, out_ref, acc_ref, *,
                 w_scale, w_bias, fold):
    r = pl.program_id(1)                     # row-block reduction axis (inner)

    @pl.when(r == 0)
    def _():
        acc_ref[...] = jnp.zeros_like(acc_ref)

    # Weights (1, lane_tile): sigmoid runs on the EUP -> effectively free in
    # this HBM-bound kernel; scale/bias are folded Python constants.
    w = jax.nn.sigmoid(s_ref[...].astype(jnp.float32)) * w_scale + w_bias

    # Upcast streamed tiles in-kernel (HBM traffic stays at native width).
    d = x_ref[...].astype(jnp.float32) - t_ref[...].astype(jnp.float32)
    contrib = w * (d * d)                    # (row_tile, lane_tile) f32

    # Fold row chunks into a small (8, lane_tile) accumulator.  Rows 8 apart
    # live in different vregs at the same sublane, so these are plain VALU
    # adds (no XLU) and the acc read-modify-write stays tiny.
    acc = acc_ref[...]
    for a in range(fold):                    # unrolled at trace time (<=32)
        acc = acc + contrib[a * 8:(a + 1) * 8, :]
    acc_ref[...] = acc

    @pl.when(r == pl.num_programs(1) - 1)
    def _():
        # (8, lane_tile) partial: 8-sublane aligned, lane-dense, unmasked.
        out_ref[...] = acc_ref[...]


def _vmem_config():
    """Generation-aware (scoped-VMEM limit, tile working-set budget)."""
    try:
        cap = int(pltpu.get_tpu_info().vmem_capacity_bytes)
    except Exception:
        cap = 64 << 20                       # conservative fallback (v7x-sized)
    if cap >= (96 << 20):
        # v5e / v6e: 128 MiB physical VMEM -> use most of it.
        return 96 << 20, 64 << 20
    # v7x: 64 MiB per TensorCore -> leave compiler/internal-scratch headroom.
    return min(48 << 20, (cap * 3) // 4), 22 << 20


def _divisor_tiles(total, quantum):
    """Multiples of `quantum` that divide `total`, ascending."""
    return [t for t in range(quantum, total + 1, quantum) if total % t == 0]


def _select_tiles(rows, hw, in_itemsize, sdf_itemsize, budget_bytes,
                  row_cap=256):
    """Pick (row_tile, lane_tile): lane_tile (contiguous DMA-row length) first,
    then grow row_tile (multiple of 8, capped) within the remaining budget."""

    def footprint(rt, lt):
        return (2 * 2 * rt * lt * in_itemsize   # x, t double-buffered
                + 2 * lt * sdf_itemsize         # sdf double-buffered
                + 8 * lt * 4                    # f32 accumulator scratch
                + 2 * 8 * lt * 4)               # partial-output buffers

    lane_cands = _divisor_tiles(hw, 128)
    # Prefer >=2 lane tiles (keeps the parallel axis wide enough to feed both
    # v7x TensorCores) as long as tiles stay DMA-efficient (>=512 lanes);
    # otherwise just take the largest tile that fits.
    pref = [t for t in lane_cands if hw // t >= 2 and t >= 512] or lane_cands

    row_cands = [t for t in _divisor_tiles(rows, 8) if t <= min(rows, row_cap)]
    min_rt = row_cands[0]

    lane_tile = 128
    for t in pref:
        if footprint(min_rt, t) <= budget_bytes:
            lane_tile = t

    row_tile = min_rt
    for t in row_cands:
        if footprint(t, lane_tile) <= budget_bytes:
            row_tile = t

    return row_tile, lane_tile


def sdf_weighted_mse_loss(inputs, target, sdf,
                          max_land_weight=1.0, min_sea_weight=0.5):
    """inputs/target: (B, C, H, W); sdf: (1, 1, H, W). Returns scalar loss."""
    B, C, H, W = inputs.shape
    assert target.shape == inputs.shape
    assert sdf.shape == (1, 1, H, W)
    rows = B * C
    hw = H * W
    # TODO(synk): spatial sizes that are not a multiple of 128 would need a
    # masked tail tile; not required for the shapes exercised here.
    assert hw % 128 == 0, "H*W must be a multiple of 128"

    # Flatten NCHW -> 2D (rows = batch*channel, lanes = spatial).  Reshape
    # only; NO dtype cast here (that would double streamed HBM bytes for bf16).
    x = inputs.reshape(rows, hw)
    t = target.reshape(rows, hw)
    s = sdf.reshape(1, hw)

    # Corner case: B*C not a multiple of 8 -> zero-pad the row axis so every
    # block stays (8,128)-tile aligned; padded rows contribute exactly 0.
    rows_p = rows
    if rows % 8 != 0:
        pad = (-rows) % 8
        x = jnp.pad(x, ((0, pad), (0, 0)))
        t = jnp.pad(t, ((0, pad), (0, 0)))
        rows_p = rows + pad

    vmem_limit, tile_budget = _vmem_config()
    row_tile, lane_tile = _select_tiles(
        rows_p, hw, x.dtype.itemsize, s.dtype.itemsize, tile_budget)
    n_lane_tiles = hw // lane_tile
    n_row_blocks = rows_p // row_tile
    fold = row_tile // 8

    kernel = functools.partial(
        _wmse_kernel,
        # NOTE: folded as Python constants — max/min weights must be plain
        # floats (as in the PyTorch module's __init__), not traced values.
        w_scale=float(max_land_weight) - float(min_sea_weight),
        w_bias=float(min_sea_weight),
        fold=fold,
    )

    partials = pl.pallas_call(
        kernel,
        out_shape=jax.ShapeDtypeStruct((n_lane_tiles * 8, lane_tile),
                                       jnp.float32),
        grid_spec=pltpu.PrefetchScalarGridSpec(
            num_scalar_prefetch=0,
            # Lane tiles on the outer ("parallel") axis: the spatial dim is
            # the big one for this loss, so this feeds both v7x TensorCores
            # even when B*C is small.  Row blocks form the inner reduction
            # axis; the sdf block index is constant across it, so the sdf
            # tile is not re-streamed per row block.
            grid=(n_lane_tiles, n_row_blocks),
            in_specs=[
                pl.BlockSpec((row_tile, lane_tile), lambda l, r: (r, l)),
                pl.BlockSpec((row_tile, lane_tile), lambda l, r: (r, l)),
                pl.BlockSpec((1, lane_tile), lambda l, r: (0, l)),
            ],
            # (8, lane_tile) partial output, resident across the row axis.
            out_specs=pl.BlockSpec((8, lane_tile), lambda l, r: (l, 0)),
            scratch_shapes=[pltpu.VMEM((8, lane_tile), jnp.float32)],
        ),
        compiler_params=pltpu.CompilerParams(
            dimension_semantics=("parallel", "arbitrary"),
            vmem_limit_bytes=vmem_limit,
        ),
    )(x, t, s)

    # Tiny final reduce + mean over the broadcasted (un-padded) shape.
    inv_n = 1.0 / float(rows * hw)
    return jnp.sum(partials) * inv_n


def _reference(inputs, target, sdf, max_land_weight=1.0, min_sea_weight=0.5):
    w = jax.nn.sigmoid(sdf) * (max_land_weight - min_sea_weight) + min_sea_weight
    se = (inputs - target) ** 2
    return jnp.mean(w * se)


if __name__ == "__main__":
    key = jax.random.PRNGKey(0)
    k1, k2, k3 = jax.random.split(key, 3)

    B, C, H, W = 2, 4, 16, 16
    inputs = jax.random.normal(k1, (B, C, H, W), dtype=jnp.float32)
    target = jax.random.normal(k2, (B, C, H, W), dtype=jnp.float32)

    # Synthetic normalized SDF in [0, 1] (stands in for the .npz-derived map).
    sdf = jax.random.uniform(k3, (1, 1, H, W), dtype=jnp.float32)

    loss = sdf_weighted_mse_loss(inputs, target, sdf,
                                 max_land_weight=1.0, min_sea_weight=0.5)
    loss = jax.block_until_ready(loss)

    ref = _reference(inputs, target, sdf, 1.0, 0.5)
    assert jnp.allclose(loss, ref, rtol=1e-5, atol=1e-6), (loss, ref)

    print("KERNEL_OK")
</pallas_src>

<mosaic_0001>
module attributes {stable_mosaic.version = 11 : i64} {
  func.func @_wmse_kernel(%arg0: i32, %arg1: i32, %arg2: memref<8x256xf32, #tpu.memory_space<vmem>>, %arg3: memref<8x256xf32, #tpu.memory_space<vmem>>, %arg4: memref<1x256xf32, #tpu.memory_space<vmem>>, %arg5: memref<8x256xf32, #tpu.memory_space<vmem>>, %arg6: memref<8x256xf32, #tpu.memory_space<vmem>>) attributes {dimension_semantics = [#tpu.dimension_semantics<parallel>, #tpu.dimension_semantics<arbitrary>], iteration_bounds = array<i64: 1, 1>, scalar_prefetch = 0 : i64, scratch_operands = 1 : i64, tpu.core_type = #tpu.core_type<tc>, window_params = [{transform_indices = @transform_0, window_bounds = array<i64: 8, 256>}, {transform_indices = @transform_1, window_bounds = array<i64: 8, 256>}, {transform_indices = @transform_2, window_bounds = array<i64: 1, 256>}, {transform_indices = @transform_3, window_bounds = array<i64: 8, 256>}]} {
    %c0_i32 = arith.constant 0 : i32
    %0 = arith.cmpi eq, %arg1, %c0_i32 : i32
    %1 = arith.extui %0 : i1 to i32
    %c0_i32_0 = arith.constant 0 : i32
    %2 = arith.cmpi ne, %1, %c0_i32_0 : i32
    scf.if %2 {
      %cst_14 = arith.constant 0.000000e+00 : f32
      %25 = vector.broadcast %cst_14 : f32 to vector<8x256xf32>
      %c0_15 = arith.constant 0 : index
      %c0_16 = arith.constant 0 : index
      %26 = vector.load %arg6[%c0_15, %c0_16] : memref<8x256xf32, #tpu.memory_space<vmem>>, vector<8x256xf32>
      tpu.vector_store %arg6[%c0_15, %c0_16], %25 {strides = array<i32>} : memref<8x256xf32, #tpu.memory_space<vmem>>, vector<8x256xf32>,
    } else {
    }
    %c0 = arith.constant 0 : index
    %c0_1 = arith.constant 0 : index
    %3 = vector.load %arg4[%c0, %c0_1] : memref<1x256xf32, #tpu.memory_space<vmem>>, vector<1x256xf32>
    %4 = arith.negf %3 : vector<1x256xf32>
    %5 = math.exp %4 : vector<1x256xf32>
    %cst = arith.constant 1.000000e+00 : f32
    %6 = vector.broadcast %cst : f32 to vector<1x256xf32>
    %7 = arith.addf %6, %5 : vector<1x256xf32>
    %8 = arith.divf %6, %7 : vector<1x256xf32>
    %cst_2 = arith.constant 5.000000e-01 : f32
    %9 = vector.broadcast %cst_2 : f32 to vector<1x256xf32>
    %10 = arith.mulf %8, %9 : vector<1x256xf32>
    %cst_3 = arith.constant 5.000000e-01 : f32
    %11 = vector.broadcast %cst_3 : f32 to vector<1x256xf32>
    %12 = arith.addf %10, %11 : vector<1x256xf32>
    %c0_4 = arith.constant 0 : index
    %c0_5 = arith.constant 0 : index
    %13 = vector.load %arg2[%c0_4, %c0_5] : memref<8x256xf32, #tpu.memory_space<vmem>>, vector<8x256xf32>
    %c0_6 = arith.constant 0 : index
    %c0_7 = arith.constant 0 : index
    %14 = vector.load %arg3[%c0_6, %c0_7] : memref<8x256xf32, #tpu.memory_space<vmem>>, vector<8x256xf32>
    %15 = arith.subf %13, %14 : vector<8x256xf32>
    %16 = arith.mulf %15, %15 : vector<8x256xf32>
    %17 = vector.broadcast %12 : vector<1x256xf32> to vector<8x256xf32>
    %18 = arith.mulf %17, %16 : vector<8x256xf32>
    %c0_8 = arith.constant 0 : index
    %c0_9 = arith.constant 0 : index
    %19 = vector.load %arg6[%c0_8, %c0_9] : memref<8x256xf32, #tpu.memory_space<vmem>>, vector<8x256xf32>
    %20 = arith.addf %19, %18 : vector<8x256xf32>
    %c0_10 = arith.constant 0 : index
    %c0_11 = arith.constant 0 : index
    %21 = vector.load %arg6[%c0_10, %c0_11] : memref<8x256xf32, #tpu.memory_space<vmem>>, vector<8x256xf32>
    tpu.vector_store %arg6[%c0_10, %c0_11], %20 {strides = array<i32>} : memref<8x256xf32, #tpu.memory_space<vmem>>, vector<8x256xf32>,
    %c0_i32_12 = arith.constant 0 : i32
    %22 = arith.cmpi eq, %arg1, %c0_i32_12 : i32
    %23 = arith.extui %22 : i1 to i32
    %c0_i32_13 = arith.constant 0 : i32
    %24 = arith.cmpi ne, %23, %c0_i32_13 : i32
    scf.if %24 {
      %c0_14 = arith.constant 0 : index
      %c0_15 = arith.constant 0 : index
      %25 = vector.load %arg6[%c0_14, %c0_15] : memref<8x256xf32, #tpu.memory_space<vmem>>, vector<8x256xf32>
      %c0_16 = arith.constant 0 : index
      %c0_17 = arith.constant 0 : index
      %26 = vector.load %arg5[%c0_16, %c0_17] : memref<8x256xf32, #tpu.memory_space<vmem>>, vector<8x256xf32>
      tpu.vector_store %arg5[%c0_16, %c0_17], %25 {strides = array<i32>} : memref<8x256xf32, #tpu.memory_space<vmem>>, vector<8x256xf32>,
    } else {
    }
    return
  }
  func.func @transform_0(%arg0: i32, %arg1: i32) -> (i32, i32) {
    %c0_i32 = arith.constant 0 : i32
    return %arg1, %arg0 : i32, i32
  }
  func.func @transform_1(%arg0: i32, %arg1: i32) -> (i32, i32) {
    %c0_i32 = arith.constant 0 : i32
    return %arg1, %arg0 : i32, i32
  }
  func.func @transform_2(%arg0: i32, %arg1: i32) -> (i32, i32) {
    %c0_i32 = arith.constant 0 : i32
    %c0_i32_0 = arith.constant 0 : i32
    return %c0_i32, %arg0 : i32, i32
  }
  func.func @transform_3(%arg0: i32, %arg1: i32) -> (i32, i32) {
    %c0_i32 = arith.constant 0 : i32
    %c0_i32_0 = arith.constant 0 : i32
    return %arg0, %c0_i32 : i32, i32
  }
}

</mosaic_0001>

<llo_original>
// kernel: tpu_custom_call.1
$region0: #{tpu_custom_call.1}
  #allocation0 [shape = 'u32[]', space=smem, size = 0x4, offset = 0x4, fixed_abs, tag = 'smem constant byte address 0x4 - core index']
  #allocation1 [shape = 'u32[144,128]{1,0:T(1,128)}', space=vmem, size = 0x12000, scoped, tag = 'internal scratch']
  #allocation2 [shape = 'f32[8,256]{1,0:T(8,128)}', space=vmem, size = 0x2000, scoped, tag = 'scratch operand']
  %s0 = inlined_call_operand.hbm [shape: f32[8,256], index: 0, kind: input, shape index: {}]
  %s1 = inlined_call_operand.hbm [shape: f32[8,256], index: 1, kind: input, shape index: {}]
  %s2 = inlined_call_operand.vmem [shape: f32[1,256], index: 2, kind: input, shape index: {}]
  %s3 = inlined_call_operand.hbm [shape: f32[8,256], index: 3, kind: output, shape index: {}]
  %s4 = sld [smem:[#allocation0]]
  $region38: #{tpu_custom_call.1} parent=0
    _
  %s6 = ssub.s32 1, %s4
  %s7 = scalar_select 0, %s6, %s4
  $region1: #{tpu_custom_call.1} parent=0
    #allocation3 [shape = 'u8[8192]{0}', space=vmem, size = 0x2000, scoped, tag = 'input window, operand 0, single buffered']
    #allocation4 [shape = 's32[1]{0}', space=sflag, size = 0x4, scoped, tag = 'scoped memory for tpu_custom_call.1']
    #allocation5 [shape = 's32[1]{0}', space=sflag, size = 0x4, scoped, tag = 'scoped memory for tpu_custom_call.1']
    #allocation6 [shape = 'u8[8192]{0}', space=vmem, size = 0x2000, scoped, tag = 'input window, operand 1, single buffered']
    #allocation7 [shape = 's32[1]{0}', space=sflag, size = 0x4, scoped, tag = 'scoped memory for tpu_custom_call.1']
    #allocation8 [shape = 'u8[8192]{0}', space=vmem, size = 0x2000, scoped, tag = 'output window, operand 0, single buffered']
    %8 = vsyncpa [#allocation4], 0
    %9 = vsyncpa [#allocation7], 0
    %10 = vsyncpa [#allocation5], 0
    // Predicated region
    $region2: #{tpu_custom_call.1} parent=1 // pred_check
      _
    $region3: #{tpu_custom_call.1} parent=1 // pred_check_branch
      %12 = sbr.rel (0) target = $region5
    $region4: #{tpu_custom_call.1} parent=1 // pred_region
      %s14 = ssub.s32 256, 256
      %15 = vsyncadd [#allocation4], %s14
      %s17 = sshll.u32 [#allocation3], 4
      %s18 = int_to_ptr.vmem [resolvable:$true] %s17
      %20 = dma.hbm_to_vmem [thread:$0]  %s0, 256, %s18, [#allocation4]
    $region5: #{tpu_custom_call.1} parent=1 // pred_fallthru
      _
    // Predicated region
    $region6: #{tpu_custom_call.1} parent=1 // pred_check
      _
    $region7: #{tpu_custom_call.1} parent=1 // pred_check_branch
      %22 = sbr.rel (0) target = $region9
    $region8: #{tpu_custom_call.1} parent=1 // pred_region
      %s24 = ssub.s32 256, 256
      %25 = vsyncadd [#allocation7], %s24
      %s27 = sshll.u32 [#allocation6], 4
      %s28 = int_to_ptr.vmem [resolvable:$true] %s27
      %30 = dma.hbm_to_vmem [thread:$0]  %s1, 256, %s28, [#allocation7]
    $region9: #{tpu_custom_call.1} parent=1 // pred_fallthru
      _
    // Predicated region
    $region10: #{tpu_custom_call.1} parent=1 // pred_check
      _
    $region11: #{tpu_custom_call.1} parent=1 // pred_check_branch
      %32 = sbr.rel (0) target = $region13
    $region12: #{tpu_custom_call.1} parent=1 // pred_region
      _
    $region13: #{tpu_custom_call.1} parent=1 // pred_fallthru
      _
    // Predicated region
    $region14: #{tpu_custom_call.1} parent=1 // pred_check
      _
    $region15: #{tpu_custom_call.1} parent=1 // pred_check_branch
      %34 = sbr.rel (0) target = $region17
    $region16: #{tpu_custom_call.1} parent=1 // pred_region
      %35 = dma.done [#allocation4], 256
    $region17: #{tpu_custom_call.1} parent=1 // pred_fallthru
      _
    // Predicated region
    $region18: #{tpu_custom_call.1} parent=1 // pred_check
      _
    $region19: #{tpu_custom_call.1} parent=1 // pred_check_branch
      %37 = sbr.rel (0) target = $region21
    $region20: #{tpu_custom_call.1} parent=1 // pred_region
      %38 = dma.done [#allocation7], 256
    $region21: #{tpu_custom_call.1} parent=1 // pred_fallthru
      _
    %p39 = scmp.eq.s32.totalorder 0, 0
    // Predicated region
    $region22: #{tpu_custom_call.1} parent=1 // pred_check
      %p40 = pneg %p39
    $region23: #{tpu_custom_call.1} parent=1 // pred_check_branch
      %42 = sbr.rel (%p40) target = $region25
    $region24: #{tpu_custom_call.1} parent=1 // pred_region
      %43 = vst [vmem:[#allocation2] sm:$0xff] 0.0
      %44 = vst [vmem:[#allocation2 + $0x8] sm:$0xff] 0.0
    $region25: #{tpu_custom_call.1} parent=1 // pred_fallthru
      _
    %v45 = vld [vmem:[%s2] sm:$0x3]
    %v46 = vxor.u32 %v45, 2147483648
    %v47 = vmul.f32 %v46, 1.442695
    %v48 = vpow.pop %v47
    %v49 = vadd.f32 %v48, 1.0
    %v50 = vrcp.pop %v49
    %v51 = vmul.f32 1.0, %v50
    %v52 = vmul.f32 %v51, 0.5
    %v53 = vadd.f32 %v52, 0.5
    %v54 = vld [vmem:[#allocation3] sm:$0xff]
    %v55 = vld [vmem:[#allocation3 + $0x8] sm:$0xff]
    %v56 = vld [vmem:[#allocation6] sm:$0xff]
    %v57 = vld [vmem:[#allocation6 + $0x8] sm:$0xff]
    %v58 = vsub.f32 %v54, %v56
    %v59 = vsub.f32 %v55, %v57
    %v60 = vmul.f32 %v58, %v58
    %v61 = vmul.f32 %v59, %v59
    %v63 = vlaneseq
    %v64 = vshrl.u32 %v63, 7
    %v65 = vsub.s32 0, %v64
    %v66 = vrot.slane %v53, %v65
    %v67 = vlaneseq
    %v68 = vshrl.u32 %v67, 7
    %v69 = vsub.s32 1, %v68
    %v70 = vrot.slane %v53, %v69
    %v73 = vmul.f32 %v66, %v60
    %v74 = vmul.f32 %v70, %v61
    %v75 = vld [vmem:[#allocation2] sm:$0xff]
    %v76 = vld [vmem:[#allocation2 + $0x8] sm:$0xff]
    %v77 = vadd.f32 %v75, %v73
    %v78 = vadd.f32 %v76, %v74
    %79 = vst [vmem:[#allocation2] sm:$0xff] %v77
    %80 = vst [vmem:[#allocation2 + $0x8] sm:$0xff] %v78
    // Predicated region
    $region26: #{tpu_custom_call.1} parent=1 // pred_check
      %p81 = pneg %p39
    $region27: #{tpu_custom_call.1} parent=1 // pred_check_branch
      %83 = sbr.rel (%p81) target = $region29
    $region28: #{tpu_custom_call.1} parent=1 // pred_region
      %v84 = vld [vmem:[#allocation2] sm:$0xff]
      %v85 = vld [vmem:[#allocation2 + $0x8] sm:$0xff]
      %86 = vst [vmem:[#allocation8] sm:$0xff] %v84
      %87 = vst [vmem:[#allocation8 + $0x8] sm:$0xff] %v85
    $region29: #{tpu_custom_call.1} parent=1 // pred_fallthru
      _
    // Predicated region
    $region30: #{tpu_custom_call.1} parent=1 // pred_check
      _
    $region31: #{tpu_custom_call.1} parent=1 // pred_check_branch
      %89 = sbr.rel (0) target = $region33
    $region32: #{tpu_custom_call.1} parent=1 // pred_region
      %s91 = ssub.s32 256, 256
      %92 = vsyncadd [#allocation5], %s91
      %s94 = sshll.u32 [#allocation8], 4
      %s95 = int_to_ptr.vmem [resolvable:$true] %s94
      %97 = dma.vmem_to_hbm [thread:$0]  %s95, 256, %s3, [#allocation5]
    $region33: #{tpu_custom_call.1} parent=1 // pred_fallthru
      _
    // Predicated region
    $region34: #{tpu_custom_call.1} parent=1 // pred_check
      _
    $region35: #{tpu_custom_call.1} parent=1 // pred_check_branch
      %99 = sbr.rel (0) target = $region37
    $region36: #{tpu_custom_call.1} parent=1 // pred_region
      %100 = dma.done [#allocation5], 256
    $region37: #{tpu_custom_call.1} parent=1 // pred_fallthru
      _
    %101 = vsyncpa [#allocation4], 1
    %102 = vsyncpa [#allocation7], 1
    %103 = vsyncpa [#allocation5], 1

</llo_original>
